<compile_context>
chip_gen: v7x
topology: tpu7x:2x2x1
jax: 0.10.0
libtpu: 0.0.40
codegen_flags: <defaults>
</compile_context>

<pallas_src>
import jax
import jax.numpy as jnp
from jax.experimental import pallas as pl
from jax.experimental.pallas import tpu as pltpu
import numpy as np


# ----------------------------- Pallas kernel ------------------------------ #
def wine_encoder_kernel(x_ref, w1_ref, w2_ref, out_ref):
    f32 = jnp.float32
    # Branch encoders (5 Linears + embedding folds + all biases) as one
    # block-diagonal matmul + ReLU; hidden column `col_one` stays 1.0.
    h = jnp.maximum(
        jnp.dot(x_ref[...], w1_ref[...], preferred_element_type=f32), 0.0)
    # Final fc (bias folded in as row `col_one` of w2).
    out_ref[...] = jnp.dot(
        h, w2_ref[...], preferred_element_type=f32).astype(out_ref.dtype)


# ----------------------- One-time parameter packing ------------------------ #
def pack_wine_encoder_params(params, cat_vocab_sizes, k_pad=128, h_pad=128):
    """Fold embeddings + all biases into two padded matrices (done once).

    Input lane layout of x (row order of w1):
      [0]                 constant 1.0  (carries all branch biases + fc-bias pin)
      [1 : 7]             numeric (6)
      [7 : 39]            flavor multihot (32)
      [39 : 39+V_g]       grapes one-hot
      ...                 region / style / winery one-hots
      [.. : ..+1]         alcohol
      [.. : ..+10]        food pairing
      [.. : 128]          zero padding
    Hidden column layout (row order of w2):
      [0:16 num | 16:32 flav | 32:48 cat | 48:56 alc | 56:64 food | 64 = 1.0 | pad]
    """
    f = lambda a: np.asarray(a, dtype=np.float32)
    w_num, b_num = f(params["w_num"]), f(params["b_num"]).reshape(-1)
    w_flav, b_flav = f(params["w_flav"]), f(params["b_flav"]).reshape(-1)
    w_cat, b_cat = f(params["w_cat"]), f(params["b_cat"]).reshape(-1)
    w_alc, b_alc = f(params["w_alc"]), f(params["b_alc"]).reshape(-1)
    w_food, b_food = f(params["w_food"]), f(params["b_food"]).reshape(-1)
    w_fc, b_fc = f(params["w_fc"]), f(params["b_fc"]).reshape(-1)
    tables = [f(params["grapes_emb"]), f(params["region_emb"]),
              f(params["wine_style_emb"]), f(params["winery_emb"])]
    E = tables[0].shape[1]

    D4 = w_num.shape[1]
    D8 = w_alc.shape[1]
    D = w_fc.shape[1]
    h_used = 3 * D4 + 2 * D8                    # fc input width (64)
    assert w_fc.shape[0] == h_used
    col_one = h_used                            # hidden col pinned to 1.0
    assert h_pad >= h_used + 1

    # Fold each embedding table into its slice of w_cat: (V, E) @ (E, D4).
    folded_cat = [tbl @ w_cat[i * E:(i + 1) * E, :]
                  for i, tbl in enumerate(tables)]

    col_num, col_flav, col_cat = 0, D4, 2 * D4
    col_alc, col_food = 3 * D4, 3 * D4 + D8

    w1 = np.zeros((k_pad, h_pad), np.float32)
    # Row 0 = constant-1 lane: every branch bias + the fc-bias pin column.
    w1[0, col_num:col_num + D4] = b_num
    w1[0, col_flav:col_flav + D4] = b_flav
    w1[0, col_cat:col_cat + D4] = b_cat
    w1[0, col_alc:col_alc + D8] = b_alc
    w1[0, col_food:col_food + D8] = b_food
    w1[0, col_one] = 1.0

    row = 1

    def put(block, col, width):
        nonlocal row
        k = block.shape[0]
        w1[row:row + k, col:col + width] = block
        row += k

    put(w_num, col_num, D4)
    put(w_flav, col_flav, D4)
    for blk in folded_cat:                      # grapes / region / style / winery
        put(blk, col_cat, D4)
    put(w_alc, col_alc, D8)
    put(w_food, col_food, D8)
    k_used = row
    assert k_used <= k_pad, (k_used, k_pad)

    w2 = np.zeros((h_pad, D), np.float32)
    w2[:h_used, :] = w_fc
    w2[col_one, :] = b_fc

    return {
        "w1": jnp.asarray(w1),                  # (128, 128)
        "w2": jnp.asarray(w2),                  # (128, 64)
        "cat_vocab_sizes": tuple(int(v) for v in cat_vocab_sizes),
        "k_pad": int(k_pad),
        "k_used": int(k_used),
        "output_dim": int(D),
    }


# ------------------------------- Wrapper ----------------------------------- #
def _round_up(x, m):
    return ((x + m - 1) // m) * m


def wine_feature_encoder(packed, numeric_feats, flavor_multihot,
                         grapes_idx, region_idx, wine_style_idx, winery_idx,
                         alcohol, food_pairing, num_side_tokens, tile_b=256):
    f32 = jnp.float32
    B = numeric_feats.shape[0]
    K = packed["k_pad"]
    D = packed["output_dim"]
    vocabs = packed["cat_vocab_sizes"]

    # ONE fused producer: ones lane + dense features + one-hot indicator lanes
    # + zero padding, directly at the lane-dense padded width K=128.
    pieces = [jnp.ones((B, 1), f32),
              numeric_feats.astype(f32),
              flavor_multihot.astype(f32),
              jax.nn.one_hot(grapes_idx, vocabs[0], dtype=f32),
              jax.nn.one_hot(region_idx, vocabs[1], dtype=f32),
              jax.nn.one_hot(wine_style_idx, vocabs[2], dtype=f32),
              jax.nn.one_hot(winery_idx, vocabs[3], dtype=f32),
              alcohol.astype(f32),
              food_pairing.astype(f32)]
    k_used = sum(p.shape[1] for p in pieces)
    if k_used < K:
        pieces.append(jnp.zeros((B, K - k_used), f32))
    x_all = jnp.concatenate(pieces, axis=1)          # (B, 128)

    # Batch grid: pad B to a multiple of the tile (tile is a multiple of 8).
    tb = max(8, min(tile_b, _round_up(B, 8)))
    B_pad = _round_up(B, tb)
    if B_pad != B:
        x_all = jnp.pad(x_all, ((0, B_pad - B), (0, 0)))

    H = packed["w1"].shape[1]                        # padded hidden width (128)
    flops = 2 * B_pad * K * H + 2 * B_pad * H * D
    bytes_accessed = 4 * (B_pad * K + K * H + H * D + B_pad * D)

    out = pl.pallas_call(
        wine_encoder_kernel,
        out_shape=jax.ShapeDtypeStruct((B_pad, D), jnp.float32),
        grid_spec=pltpu.PrefetchScalarGridSpec(
            num_scalar_prefetch=0,
            grid=(B_pad // tb,),
            in_specs=[
                pl.BlockSpec((tb, K), lambda i: (i, 0)),   # streamed activations
                pl.BlockSpec((K, H), lambda i: (0, 0)),    # resident W1
                pl.BlockSpec((H, D), lambda i: (0, 0)),    # resident W2
            ],
            out_specs=pl.BlockSpec((tb, D), lambda i: (i, 0)),
        ),
        compiler_params=pltpu.CompilerParams(
            dimension_semantics=("parallel",)),
        cost_estimate=pl.CostEstimate(
            flops=flops, transcendentals=0, bytes_accessed=bytes_accessed),
    )(x_all, packed["w1"], packed["w2"])

    side_embedding = out[:B]
    token_dim = D // num_side_tokens
    return side_embedding.reshape(B, num_side_tokens, token_dim)


# --------------------------- Pure-JAX reference ---------------------------- #
def wine_feature_encoder_ref(params, numeric_feats, flavor_multihot,
                             grapes_idx, region_idx, wine_style_idx,
                             winery_idx, alcohol, food_pairing,
                             num_side_tokens):
    relu = lambda x: jnp.maximum(x, 0.0)
    num_out = relu(numeric_feats @ params["w_num"] + params["b_num"])
    flavor_out = relu(flavor_multihot @ params["w_flav"] + params["b_flav"])
    cat_concat = jnp.concatenate([
        params["grapes_emb"][grapes_idx],
        params["region_emb"][region_idx],
        params["wine_style_emb"][wine_style_idx],
        params["winery_emb"][winery_idx],
    ], axis=1)
    cat_out = relu(cat_concat @ params["w_cat"] + params["b_cat"])
    alcohol_out = relu(alcohol @ params["w_alc"] + params["b_alc"])
    food_out = relu(food_pairing @ params["w_food"] + params["b_food"])
    combined = jnp.concatenate(
        [num_out, flavor_out, cat_out, alcohol_out, food_out], axis=1)
    side = combined @ params["w_fc"] + params["b_fc"]
    B, D = side.shape
    return side.reshape(B, num_side_tokens, D // num_side_tokens)


# --------------------------------- Main ------------------------------------ #
if __name__ == "__main__":
    # Module hyper-parameters (small, consistent with the PyTorch __init__).
    numeric_dim = 6
    flavor_vocab_size = 32
    flavor_embed_dim = 16          # unused by forward (matches PyTorch module)
    cat_vocab_sizes = (10, 12, 14, 16)
    cat_embed_dim = 8
    food_pairing_dim = 10
    output_dim = 64
    num_side_tokens = 4

    D4 = output_dim // 4
    D8 = output_dim // 8
    total_dim = 3 * D4 + 2 * D8    # == output_dim here

    B = 8

    key = jax.random.PRNGKey(0)
    ks = iter(jax.random.split(key, 32))
    init = lambda shape, scale=0.05: (
        jax.random.normal(next(ks), shape, dtype=jnp.float32) * scale)

    params = {
        "w_num": init((numeric_dim, D4)),
        "b_num": init((1, D4)),
        "w_flav": init((flavor_vocab_size, D4)),
        "b_flav": init((1, D4)),
        "grapes_emb": init((cat_vocab_sizes[0], cat_embed_dim), 1.0),
        "region_emb": init((cat_vocab_sizes[1], cat_embed_dim), 1.0),
        "wine_style_emb": init((cat_vocab_sizes[2], cat_embed_dim), 1.0),
        "winery_emb": init((cat_vocab_sizes[3], cat_embed_dim), 1.0),
        "w_cat": init((cat_embed_dim * 4, D4)),
        "b_cat": init((1, D4)),
        "w_alc": init((1, D8)),
        "b_alc": init((1, D8)),
        "w_food": init((food_pairing_dim, D8)),
        "b_food": init((1, D8)),
        "w_fc": init((total_dim, output_dim)),
        "b_fc": init((1, output_dim)),
    }

    # Pack (fold embeddings + biases, pad to 128) ONCE outside the call path.
    packed = pack_wine_encoder_params(params, cat_vocab_sizes)
    packed = {k: (jax.block_until_ready(v) if isinstance(v, jnp.ndarray) else v)
              for k, v in packed.items()}

    # Deterministic example inputs.
    numeric_feats = jax.random.normal(next(ks), (B, numeric_dim), jnp.float32)
    flavor_multihot = (
        jax.random.uniform(next(ks), (B, flavor_vocab_size)) < 0.3
    ).astype(jnp.float32)
    grapes_idx = jax.random.randint(next(ks), (B,), 0, cat_vocab_sizes[0])
    region_idx = jax.random.randint(next(ks), (B,), 0, cat_vocab_sizes[1])
    wine_style_idx = jax.random.randint(next(ks), (B,), 0, cat_vocab_sizes[2])
    winery_idx = jax.random.randint(next(ks), (B,), 0, cat_vocab_sizes[3])
    alcohol = jax.random.normal(next(ks), (B, 1), jnp.float32)
    food_pairing = jax.random.normal(next(ks), (B, food_pairing_dim),
                                     jnp.float32)

    out = wine_feature_encoder(
        packed, numeric_feats, flavor_multihot, grapes_idx, region_idx,
        wine_style_idx, winery_idx, alcohol, food_pairing, num_side_tokens)
    out = jax.block_until_ready(out)

    ref = wine_feature_encoder_ref(
        params, numeric_feats, flavor_multihot, grapes_idx, region_idx,
        wine_style_idx, winery_idx, alcohol, food_pairing, num_side_tokens)

    assert out.shape == (B, num_side_tokens, output_dim // num_side_tokens)
    np.testing.assert_allclose(np.asarray(out), np.asarray(ref),
                               rtol=1e-5, atol=1e-5)
    print("KERNEL_OK")
</pallas_src>

<mosaic_0001>
module attributes {stable_mosaic.version = 11 : i64} {
  func.func @wine_encoder_kernel(%arg0: i32, %arg1: memref<8x128xf32, #tpu.memory_space<vmem>>, %arg2: memref<128x128xf32, #tpu.memory_space<vmem>>, %arg3: memref<128x64xf32, #tpu.memory_space<vmem>>, %arg4: memref<8x64xf32, #tpu.memory_space<vmem>>) attributes {dimension_semantics = [#tpu.dimension_semantics<parallel>], iteration_bounds = array<i64: 1>, scalar_prefetch = 0 : i64, scratch_operands = 0 : i64, tpu.core_type = #tpu.core_type<tc>, window_params = [{transform_indices = @transform_0, window_bounds = array<i64: 8, 128>}, {pipeline_mode = #tpu.pipeline_mode<synchronous>, transform_indices = @transform_1, window_bounds = array<i64: 128, 128>}, {pipeline_mode = #tpu.pipeline_mode<synchronous>, transform_indices = @transform_2, window_bounds = array<i64: 128, 64>}, {transform_indices = @transform_3, window_bounds = array<i64: 8, 64>}]} {
    %c0 = arith.constant 0 : index
    %c0_0 = arith.constant 0 : index
    %0 = vector.load %arg1[%c0, %c0_0] : memref<8x128xf32, #tpu.memory_space<vmem>>, vector<8x128xf32>
    %c0_1 = arith.constant 0 : index
    %c0_2 = arith.constant 0 : index
    %1 = vector.load %arg2[%c0_1, %c0_2] : memref<128x128xf32, #tpu.memory_space<vmem>>, vector<128x128xf32>
    %cst = arith.constant dense<0.000000e+00> : vector<8x128xf32>
    %2 = tpu.matmul %0, %1, %cst {dimension_numbers = #tpu.dot_dimension_numbers<[1], [0], [0], [1], [0, 0, 1, 1], [], []>} : vector<8x128xf32>, vector<128x128xf32>, vector<8x128xf32> -> vector<8x128xf32>
    %cst_3 = arith.constant 0.000000e+00 : f32
    %3 = vector.broadcast %cst_3 : f32 to vector<8x128xf32>
    %4 = arith.maximumf %2, %3 : vector<8x128xf32>
    %c0_4 = arith.constant 0 : index
    %c0_5 = arith.constant 0 : index
    %5 = vector.load %arg3[%c0_4, %c0_5] : memref<128x64xf32, #tpu.memory_space<vmem>>, vector<128x64xf32>
    %cst_6 = arith.constant dense<0.000000e+00> : vector<8x64xf32>
    %6 = tpu.matmul %4, %5, %cst_6 {dimension_numbers = #tpu.dot_dimension_numbers<[1], [0], [0], [1], [0, 0, 1, 1], [], []>} : vector<8x128xf32>, vector<128x64xf32>, vector<8x64xf32> -> vector<8x64xf32>
    %c0_7 = arith.constant 0 : index
    %c0_8 = arith.constant 0 : index
    %7 = vector.load %arg4[%c0_7, %c0_8] : memref<8x64xf32, #tpu.memory_space<vmem>>, vector<8x64xf32>
    tpu.vector_store %arg4[%c0_7, %c0_8], %6 {strides = array<i32>} : memref<8x64xf32, #tpu.memory_space<vmem>>, vector<8x64xf32>,
    return
  }
  func.func @transform_0(%arg0: i32) -> (i32, i32) {
    %c0_i32 = arith.constant 0 : i32
    %c0_i32_0 = arith.constant 0 : i32
    return %arg0, %c0_i32 : i32, i32
  }
  func.func @transform_1(%arg0: i32) -> (i32, i32) {
    %c0_i32 = arith.constant 0 : i32
    %c0_i32_0 = arith.constant 0 : i32
    %c0_i32_1 = arith.constant 0 : i32
    return %c0_i32, %c0_i32_0 : i32, i32
  }
  func.func @transform_2(%arg0: i32) -> (i32, i32) {
    %c0_i32 = arith.constant 0 : i32
    %c0_i32_0 = arith.constant 0 : i32
    %c0_i32_1 = arith.constant 0 : i32
    return %c0_i32, %c0_i32_0 : i32, i32
  }
  func.func @transform_3(%arg0: i32) -> (i32, i32) {
    %c0_i32 = arith.constant 0 : i32
    %c0_i32_0 = arith.constant 0 : i32
    return %arg0, %c0_i32 : i32, i32
  }
}

</mosaic_0001>

<llo_original>
// kernel: tpu_custom_call.1
$region0: #{tpu_custom_call.1}
  #allocation0 [shape = 'u32[]', space=smem, size = 0x4, offset = 0x4, fixed_abs, tag = 'smem constant byte address 0x4 - core index']
  #allocation1 [shape = 'u32[144,128]{1,0:T(1,128)}', space=vmem, size = 0x12000, scoped, tag = 'internal scratch']
  %s0 = inlined_call_operand.vmem [shape: f32[8,128], index: 0, kind: input, shape index: {}]
  %s1 = inlined_call_operand.vmem [shape: f32[128,128], index: 1, kind: input, shape index: {}]
  %s2 = inlined_call_operand.vmem [shape: f32[128,64], index: 2, kind: input, shape index: {}]
  %s3 = inlined_call_operand.hbm [shape: f32[8,64], index: 3, kind: output, shape index: {}]
  %s4 = sld [smem:[#allocation0]]
  $region22: #{tpu_custom_call.1} parent=0
    _
  %s6 = ssub.s32 1, %s4
  %s7 = scalar_select 0, %s6, %s4
  $region1: #{tpu_custom_call.1} parent=0
    #allocation2 [shape = 'u8[4096]{0}', space=vmem, size = 0x1000, scoped, tag = 'output window, operand 0, single buffered']
    #allocation3 [shape = 's32[1]{0}', space=sflag, size = 0x4, scoped, tag = 'scoped memory for tpu_custom_call.1']
    %8 = vsyncpa [#allocation3], 0
    // Predicated region
    $region2: #{tpu_custom_call.1} parent=1 // pred_check
      _
    $region3: #{tpu_custom_call.1} parent=1 // pred_check_branch
      %10 = sbr.rel (0) target = $region5
    $region4: #{tpu_custom_call.1} parent=1 // pred_region
      _
    $region5: #{tpu_custom_call.1} parent=1 // pred_fallthru
      _
    // Predicated region
    $region6: #{tpu_custom_call.1} parent=1 // pred_check
      _
    $region7: #{tpu_custom_call.1} parent=1 // pred_check_branch
      %12 = sbr.rel (0) target = $region9
    $region8: #{tpu_custom_call.1} parent=1 // pred_region
      _
    $region9: #{tpu_custom_call.1} parent=1 // pred_fallthru
      _
    // Predicated region
    $region10: #{tpu_custom_call.1} parent=1 // pred_check
      _
    $region11: #{tpu_custom_call.1} parent=1 // pred_check_branch
      %14 = sbr.rel (0) target = $region13
    $region12: #{tpu_custom_call.1} parent=1 // pred_region
      _
    $region13: #{tpu_custom_call.1} parent=1 // pred_fallthru
      _
    %v15 = vld [vmem:[%s0] sm:$0xff]
    %v16 = vld [vmem:[%s1] sm:$0xff]
    %v17 = vld [vmem:[%s1 + $0x8] sm:$0xff]
    %v18 = vld [vmem:[%s1 + $0x10] sm:$0xff]
    %v19 = vld [vmem:[%s1 + $0x18] sm:$0xff]
    %v20 = vld [vmem:[%s1 + $0x20] sm:$0xff]
    %v21 = vld [vmem:[%s1 + $0x28] sm:$0xff]
    %v22 = vld [vmem:[%s1 + $0x30] sm:$0xff]
    %v23 = vld [vmem:[%s1 + $0x38] sm:$0xff]
    %v24 = vld [vmem:[%s1 + $0x40] sm:$0xff]
    %v25 = vld [vmem:[%s1 + $0x48] sm:$0xff]
    %v26 = vld [vmem:[%s1 + $0x50] sm:$0xff]
    %v27 = vld [vmem:[%s1 + $0x58] sm:$0xff]
    %v28 = vld [vmem:[%s1 + $0x60] sm:$0xff]
    %v29 = vld [vmem:[%s1 + $0x68] sm:$0xff]
    %v30 = vld [vmem:[%s1 + $0x70] sm:$0xff]
    %v31 = vld [vmem:[%s1 + $0x78] sm:$0xff]
    %32 = vmatprep.subr.mxu0 0.0
    %33 = vmatpush1.msra.mxu0 %v16
    %34 = vmatprep.subr.mxu0 0.0
    %35 = vmatpush1.msra.mxu0 %v17
    %36 = vmatprep.subr.mxu0 0.0
    %37 = vmatpush1.msra.mxu0 %v18
    %38 = vmatprep.subr.mxu0 0.0
    %39 = vmatpush1.msra.mxu0 %v19
    %40 = vmatprep.subr.mxu0 0.0
    %41 = vmatpush1.msra.mxu0 %v20
    %42 = vmatprep.subr.mxu0 0.0
    %43 = vmatpush1.msra.mxu0 %v21
    %44 = vmatprep.subr.mxu0 0.0
    %45 = vmatpush1.msra.mxu0 %v22
    %46 = vmatprep.subr.mxu0 0.0
    %47 = vmatpush1.msra.mxu0 %v23
    %48 = vmatprep.subr.mxu0 0.0
    %49 = vmatpush1.msra.mxu0 %v24
    %50 = vmatprep.subr.mxu0 0.0
    %51 = vmatpush1.msra.mxu0 %v25
    %52 = vmatprep.subr.mxu0 0.0
    %53 = vmatpush1.msra.mxu0 %v26
    %54 = vmatprep.subr.mxu0 0.0
    %55 = vmatpush1.msra.mxu0 %v27
    %56 = vmatprep.subr.mxu0 0.0
    %57 = vmatpush1.msra.mxu0 %v28
    %58 = vmatprep.subr.mxu0 0.0
    %59 = vmatpush1.msra.mxu0 %v29
    %60 = vmatprep.subr.mxu0 0.0
    %61 = vmatpush1.msra.mxu0 %v30
    %62 = vmatprep.subr.mxu0 0.0
    %63 = vmatpush1.msra.mxu0 %v31
    %64 = vmatprep.subr.mxu0 0.0
    %65 = vmatpush1.msra.mxu0 0.0
    %66 = vmatprep.subr.mxu0 0.0
    %67 = vmatpush1.msra.mxu0 0.0
    %68 = vmatprep.subr.mxu0 0.0
    %69 = vmatpush1.msra.mxu0 0.0
    %70 = vmatprep.subr.mxu0 0.0
    %71 = vmatpush1.msra.mxu0 0.0
    %72 = vmatprep.subr.mxu0 0.0
    %73 = vmatpush1.msra.mxu0 0.0
    %74 = vmatprep.subr.mxu0 0.0
    %75 = vmatpush1.msra.mxu0 0.0
    %76 = vmatprep.subr.mxu0 0.0
    %77 = vmatpush1.msra.mxu0 0.0
    %78 = vmatprep.subr.mxu0 0.0
    %79 = vmatpush1.msra.mxu0 0.0
    %80 = vmatprep.subr.mxu0 0.0
    %81 = vmatpush1.msra.mxu0 0.0
    %82 = vmatprep.subr.mxu0 0.0
    %83 = vmatpush1.msra.mxu0 0.0
    %84 = vmatprep.subr.mxu0 0.0
    %85 = vmatpush1.msra.mxu0 0.0
    %86 = vmatprep.subr.mxu0 0.0
    %87 = vmatpush1.msra.mxu0 0.0
    %88 = vmatprep.subr.mxu0 0.0
    %89 = vmatpush1.msra.mxu0 0.0
    %90 = vmatprep.subr.mxu0 0.0
    %91 = vmatpush1.msra.mxu0 0.0
    %92 = vmatprep.subr.mxu0 0.0
    %93 = vmatpush1.msra.mxu0 0.0
    %94 = vmatprep.subr.mxu0 0.0
    %95 = vmatpush1.msra.mxu0 0.0
    %96 = vmatprep.mubr.f32.mxu0 0.0
    %97 = vmatmul.mubr.f32.gmra.mrb[0].mxu0 %v15
    %v98 = vpop.f32.mrb[0].mxu0
    %v99 = vadd.f32 0.0, %v98
    %v100 = vpop.f32.mrb[0].mxu0
    %101 = vdwg.mxu0
    %v102 = vmax.f32 %v99, 0.0
    %v103 = vld [vmem:[%s2] sm:$0xff]
    %v104 = vld [vmem:[%s2 + $0x8] sm:$0xff]
    %v105 = vld [vmem:[%s2 + $0x10] sm:$0xff]
    %v106 = vld [vmem:[%s2 + $0x18] sm:$0xff]
    %v107 = vld [vmem:[%s2 + $0x20] sm:$0xff]
    %v108 = vld [vmem:[%s2 + $0x28] sm:$0xff]
    %v109 = vld [vmem:[%s2 + $0x30] sm:$0xff]
    %v110 = vld [vmem:[%s2 + $0x38] sm:$0xff]
    %v111 = vld [vmem:[%s2 + $0x40] sm:$0xff]
    %v112 = vld [vmem:[%s2 + $0x48] sm:$0xff]
    %v113 = vld [vmem:[%s2 + $0x50] sm:$0xff]
    %v114 = vld [vmem:[%s2 + $0x58] sm:$0xff]
    %v115 = vld [vmem:[%s2 + $0x60] sm:$0xff]
    %v116 = vld [vmem:[%s2 + $0x68] sm:$0xff]
    %v117 = vld [vmem:[%s2 + $0x70] sm:$0xff]
    %v118 = vld [vmem:[%s2 + $0x78] sm:$0xff]
    %119 = vmatprep.subr.mxu0 0.0
    %120 = vmatpush1.msra.mxu0 %v103
    %121 = vmatprep.subr.mxu0 0.0
    %122 = vmatpush1.msra.mxu0 %v104
    %123 = vmatprep.subr.mxu0 0.0
    %124 = vmatpush1.msra.mxu0 %v105
    %125 = vmatprep.subr.mxu0 0.0
    %126 = vmatpush1.msra.mxu0 %v106
    %127 = vmatprep.subr.mxu0 0.0
    %128 = vmatpush1.msra.mxu0 %v107
    %129 = vmatprep.subr.mxu0 0.0
    %130 = vmatpush1.msra.mxu0 %v108
    %131 = vmatprep.subr.mxu0 0.0
    %132 = vmatpush1.msra.mxu0 %v109
    %133 = vmatprep.subr.mxu0 0.0
    %134 = vmatpush1.msra.mxu0 %v110
    %135 = vmatprep.subr.mxu0 0.0
    %136 = vmatpush1.msra.mxu0 %v111
    %137 = vmatprep.subr.mxu0 0.0
    %138 = vmatpush1.msra.mxu0 %v112
    %139 = vmatprep.subr.mxu0 0.0
    %140 = vmatpush1.msra.mxu0 %v113
    %141 = vmatprep.subr.mxu0 0.0
    %142 = vmatpush1.msra.mxu0 %v114
    %143 = vmatprep.subr.mxu0 0.0
    %144 = vmatpush1.msra.mxu0 %v115
    %145 = vmatprep.subr.mxu0 0.0
    %146 = vmatpush1.msra.mxu0 %v116
    %147 = vmatprep.subr.mxu0 0.0
    %148 = vmatpush1.msra.mxu0 %v117
    %149 = vmatprep.subr.mxu0 0.0
    %150 = vmatpush1.msra.mxu0 %v118
    %151 = vmatprep.subr.mxu0 0.0
    %152 = vmatpush1.msra.mxu0 0.0
    %153 = vmatprep.subr.mxu0 0.0
    %154 = vmatpush1.msra.mxu0 0.0
    %155 = vmatprep.subr.mxu0 0.0
    %156 = vmatpush1.msra.mxu0 0.0
    %157 = vmatprep.subr.mxu0 0.0
    %158 = vmatpush1.msra.mxu0 0.0
    %159 = vmatprep.subr.mxu0 0.0
    %160 = vmatpush1.msra.mxu0 0.0
    %161 = vmatprep.subr.mxu0 0.0
    %162 = vmatpush1.msra.mxu0 0.0
    %163 = vmatprep.subr.mxu0 0.0
    %164 = vmatpush1.msra.mxu0 0.0
    %165 = vmatprep.subr.mxu0 0.0
    %166 = vmatpush1.msra.mxu0 0.0
    %167 = vmatprep.subr.mxu0 0.0
    %168 = vmatpush1.msra.mxu0 0.0
    %169 = vmatprep.subr.mxu0 0.0
    %170 = vmatpush1.msra.mxu0 0.0
    %171 = vmatprep.subr.mxu0 0.0
    %172 = vmatpush1.msra.mxu0 0.0
    %173 = vmatprep.subr.mxu0 0.0
    %174 = vmatpush1.msra.mxu0 0.0
    %175 = vmatprep.subr.mxu0 0.0
    %176 = vmatpush1.msra.mxu0 0.0
    %177 = vmatprep.subr.mxu0 0.0
    %178 = vmatpush1.msra.mxu0 0.0
    %179 = vmatprep.subr.mxu0 0.0
    %180 = vmatpush1.msra.mxu0 0.0
    %181 = vmatprep.subr.mxu0 0.0
    %182 = vmatpush1.msra.mxu0 0.0
    %183 = vmatprep.mubr.f32.mxu0 0.0
    %184 = vmatmul.mubr.f32.gmra.mrb[0].mxu0 %v102
    %v185 = vpop.f32.mrb[0].mxu0
    %v186 = vadd.f32 0.0, %v185
    %v187 = vpop.f32.mrb[0].mxu0
    %188 = vdwg.mxu0
    %vm189 = vcmask 523264
    %190 = vst.msk [vmem:[#allocation2] sm:$0xff] %vm189, %v186
    // Predicated region
    $region14: #{tpu_custom_call.1} parent=1 // pred_check
      _
    $region15: #{tpu_custom_call.1} parent=1 // pred_check_branch
      %192 = sbr.rel (0) target = $region17
    $region16: #{tpu_custom_call.1} parent=1 // pred_region
      %s194 = ssub.s32 128, 128
      %195 = vsyncadd [#allocation3], %s194
      %s197 = sshll.u32 [#allocation2], 4
      %s198 = int_to_ptr.vmem [resolvable:$true] %s197
      %200 = dma.vmem_to_hbm [thread:$0]  %s198, 128, %s3, [#allocation3]
    $region17: #{tpu_custom_call.1} parent=1 // pred_fallthru
      _
    // Predicated region
    $region18: #{tpu_custom_call.1} parent=1 // pred_check
      _
    $region19: #{tpu_custom_call.1} parent=1 // pred_check_branch
      %202 = sbr.rel (0) target = $region21
    $region20: #{tpu_custom_call.1} parent=1 // pred_region
      %203 = dma.done [#allocation3], 128
    $region21: #{tpu_custom_call.1} parent=1 // pred_fallthru
      _
    %204 = vsyncpa [#allocation3], 1

</llo_original>
